<compile_context>
chip_gen: v6e
topology: v6e:2x2x1
jax: 0.10.0
libtpu: 0.0.40
codegen_flags: <defaults>
</compile_context>

<pallas_src>
import functools

import jax
import jax.numpy as jnp
from jax.experimental import pallas as pl
from jax.experimental.pallas import tpu as pltpu


def _round_up(x, m):
    return ((x + m - 1) // m) * m


def _padded_tile_bytes(rows, cols, itemsize):
    # VMEM tiles are laid out in (8 sublane x 128 lane) granules.
    return _round_up(max(int(rows), 1), 8) * _round_up(max(int(cols), 1), 128) * itemsize


def _default_block_batch(batch):
    if batch <= 128:
        return batch
    # Aim for ~8 grid steps (good pipelining; feeds both v7x TensorCores),
    # lane-dense multiples of 128, capped at 2048 rows per tile.
    return min(2048, _round_up(pl.cdiv(batch, 8), 128))


def _fused_mlp_kernel(x_ref, *refs, num_layers):
    """Fused MLP forward for one batch tile.

    refs = (w0, b0, w1, b1, ..., w_{L-1}, b_{L-1}, o_ref)
      x_ref: [TB, Din]       w_i: [Din_i, Dout_i]      b_i: [1, Dout_i] (f32)
      o_ref: [n_output, TB]  (transposed so stores are lane-dense)
    """
    o_ref = refs[-1]
    wb = refs[:-1]
    in_dtype = x_ref.dtype

    h = x_ref[...]
    for i in range(num_layers):
        w = wb[2 * i][...]
        b = wb[2 * i + 1][...]                       # broadcast over rows
        y = jnp.dot(h, w, preferred_element_type=jnp.float32) + b
        if i == num_layers - 1:
            h = jax.nn.sigmoid(y)                    # EUP exp path, f32
        else:
            # ReLU on the VPU; keep matmul inputs in the streaming dtype
            # (no-op for f32, re-packs to bf16 when compute_dtype=bf16).
            h = jnp.maximum(y, 0.0).astype(in_dtype)
    # [TB, n_output] -> [n_output, TB]: tiny XLU transpose makes the store a
    # full 128-lane vst instead of a 1-wide masked store per row.
    o_ref[...] = h.T.astype(o_ref.dtype)


def simple_regression_forward(x, params, *, block_batch=None, compute_dtype=None):
    """Forward pass of SimpleRegression as ONE fused Pallas kernel.

    x: [batch, input_width] f32
    params: list of (W [din, dout], b [dout]) — hidden layers + final layer.
    compute_dtype: optional (e.g. jnp.bfloat16) cast of x and W at the wrapper
      boundary; accumulation / bias / sigmoid stay f32.
    """
    batch, din = x.shape
    n_layers = len(params)
    n_output = params[-1][0].shape[1]

    if compute_dtype is not None:
        x = x.astype(compute_dtype)
        params = [(w.astype(compute_dtype), b) for (w, b) in params]

    if block_batch is None:
        block_batch = _default_block_batch(batch)
    block_batch = int(min(block_batch, batch))
    if block_batch < batch:
        # Multi-tile grid: keep tiles lane-dense (out block last dim % 128 == 0).
        block_batch = _round_up(block_batch, 128)
    num_tiles = pl.cdiv(batch, block_batch)

    x_itemsize = jnp.dtype(x.dtype).itemsize

    # --- BlockSpecs ---------------------------------------------------------
    # x: tiled along batch (auto double-buffered). Weights/biases: constant
    # index_map -> VMEM-resident across the whole grid, loaded once.
    in_specs = [pl.BlockSpec((block_batch, din), lambda i: (i, 0))]
    flat_inputs = [x]
    for (w, b) in params:
        dw_in, dw_out = w.shape
        in_specs.append(pl.BlockSpec((dw_in, dw_out), lambda i: (0, 0)))
        in_specs.append(pl.BlockSpec((1, dw_out), lambda i: (0, 0)))
        flat_inputs.append(w)
        flat_inputs.append(b.reshape(1, dw_out).astype(jnp.float32))

    # Transposed, lane-dense output layout: (n_output, batch).
    out_specs = pl.BlockSpec((n_output, block_batch), lambda i: (0, i))
    out_shape = jax.ShapeDtypeStruct((n_output, batch), jnp.float32)

    # --- VMEM budget --------------------------------------------------------
    max_width = max([din] + [w.shape[1] for w, _ in params])
    weight_bytes = sum(
        _padded_tile_bytes(w.shape[0], w.shape[1], jnp.dtype(w.dtype).itemsize)
        + _padded_tile_bytes(1, w.shape[1], 4)
        for w, _ in params
    )
    needed = (
        2 * _padded_tile_bytes(block_batch, din, x_itemsize)     # x, double-buffered
        + 2 * _padded_tile_bytes(n_output, block_batch, 4)       # out, double-buffered
        + 2 * weight_bytes                                       # resident weights (x2 buf)
        + 3 * _padded_tile_bytes(block_batch, max_width, 4)      # live activations headroom
    )
    vmem_limit = int(min(100 * 1024 * 1024, max(needed + (4 << 20), 24 << 20)))

    # --- Cost estimate (advisory) --------------------------------------------
    flops = 2 * batch * sum(w.shape[0] * w.shape[1] for w, _ in params)
    bytes_accessed = (
        batch * din * x_itemsize
        + sum(w.size * jnp.dtype(w.dtype).itemsize + b.size * 4 for w, b in params)
        + batch * n_output * 4
    )
    cost = pl.CostEstimate(flops=flops,
                           transcendentals=batch * n_output,
                           bytes_accessed=bytes_accessed)

    kernel = functools.partial(_fused_mlp_kernel, num_layers=n_layers)

    out_t = pl.pallas_call(
        kernel,
        out_shape=out_shape,
        grid=(num_tiles,),
        in_specs=in_specs,
        out_specs=out_specs,
        compiler_params=pltpu.CompilerParams(
            dimension_semantics=("parallel",),   # batch axis -> both TCs on v7x
            vmem_limit_bytes=vmem_limit,
        ),
        cost_estimate=cost,
    )(*flat_inputs)

    return out_t.T  # [batch, n_output]


def init_params(key, input_width, n_output, num_hidden_layers, hidden_layer_size):
    """Deterministic init mirroring nn.Linear's default U(-1/sqrt(fan_in), 1/sqrt(fan_in))."""
    dims = [input_width] + [hidden_layer_size] * num_hidden_layers + [n_output]
    params = []
    for i in range(len(dims) - 1):
        din, dout = dims[i], dims[i + 1]
        key, kw, kb = jax.random.split(key, 3)
        bound = 1.0 / (din ** 0.5)
        w = jax.random.uniform(kw, (din, dout), jnp.float32, -bound, bound)
        b = jax.random.uniform(kb, (dout,), jnp.float32, -bound, bound)
        params.append((w, b))
    return params


def reference_forward(x, params):
    out = x
    n_layers = len(params)
    for i, (w, b) in enumerate(params):
        out = out @ w + b
        if i == n_layers - 1:
            out = jax.nn.sigmoid(out)
        else:
            out = jnp.maximum(out, 0.0)
    return out


if __name__ == "__main__":
    input_width = 32
    n_output = 1
    num_hidden_layers = 2     # -> 3 linear layers total, as in the nn.Module
    hidden_layer_size = 32

    key = jax.random.PRNGKey(0)
    key, kx1, kx2 = jax.random.split(key, 3)
    params = init_params(key, input_width, n_output, num_hidden_layers,
                         hidden_layer_size)

    # 1) Small batch: single tile (block == full batch).
    x_small = jax.random.normal(kx1, (8, input_width), jnp.float32)
    out_small = jax.block_until_ready(simple_regression_forward(x_small, params))
    ref_small = reference_forward(x_small, params)
    assert out_small.shape == (8, n_output), out_small.shape
    assert jnp.allclose(out_small, ref_small, atol=1e-5, rtol=1e-5)

    # 2) Non-tile-aligned batch: multi-step grid + masked last-block writeback
    #    (no jnp.pad path).
    x_big = jax.random.normal(kx2, (300, input_width), jnp.float32)
    out_big = jax.block_until_ready(simple_regression_forward(x_big, params))
    ref_big = reference_forward(x_big, params)
    assert out_big.shape == (300, n_output), out_big.shape
    assert jnp.allclose(out_big, ref_big, atol=1e-5, rtol=1e-5)

    # 3) bf16 streaming dtype (halves HBM traffic); f32 accumulation/sigmoid.
    out_bf16 = jax.block_until_ready(
        simple_regression_forward(x_big, params, compute_dtype=jnp.bfloat16))
    assert jnp.allclose(out_bf16, ref_big, atol=3e-2, rtol=3e-2)

    print("KERNEL_OK")
</pallas_src>

<mosaic_0001>
module attributes {stable_mosaic.version = 11 : i64} {
  func.func @_fused_mlp_kernel(%arg0: i32, %arg1: memref<8x32xf32, #tpu.memory_space<vmem>>, %arg2: memref<32x32xf32, #tpu.memory_space<vmem>>, %arg3: memref<1x32xf32, #tpu.memory_space<vmem>>, %arg4: memref<32x32xf32, #tpu.memory_space<vmem>>, %arg5: memref<1x32xf32, #tpu.memory_space<vmem>>, %arg6: memref<32x1xf32, #tpu.memory_space<vmem>>, %arg7: memref<1x1xf32, #tpu.memory_space<vmem>>, %arg8: memref<1x8xf32, #tpu.memory_space<vmem>>) attributes {dimension_semantics = [#tpu.dimension_semantics<parallel>], iteration_bounds = array<i64: 1>, scalar_prefetch = 0 : i64, scratch_operands = 0 : i64, tpu.core_type = #tpu.core_type<tc>, window_params = [{transform_indices = @transform_0, window_bounds = array<i64: 8, 32>}, {pipeline_mode = #tpu.pipeline_mode<synchronous>, transform_indices = @transform_1, window_bounds = array<i64: 32, 32>}, {pipeline_mode = #tpu.pipeline_mode<synchronous>, transform_indices = @transform_2, window_bounds = array<i64: 1, 32>}, {pipeline_mode = #tpu.pipeline_mode<synchronous>, transform_indices = @transform_3, window_bounds = array<i64: 32, 32>}, {pipeline_mode = #tpu.pipeline_mode<synchronous>, transform_indices = @transform_4, window_bounds = array<i64: 1, 32>}, {pipeline_mode = #tpu.pipeline_mode<synchronous>, transform_indices = @transform_5, window_bounds = array<i64: 32, 1>}, {pipeline_mode = #tpu.pipeline_mode<synchronous>, transform_indices = @transform_6, window_bounds = array<i64: 1, 1>}, {transform_indices = @transform_7, window_bounds = array<i64: 1, 8>}]} {
    %c0 = arith.constant 0 : index
    %c0_0 = arith.constant 0 : index
    %0 = vector.load %arg1[%c0, %c0_0] : memref<8x32xf32, #tpu.memory_space<vmem>>, vector<8x32xf32>
    %c0_1 = arith.constant 0 : index
    %c0_2 = arith.constant 0 : index
    %1 = vector.load %arg2[%c0_1, %c0_2] : memref<32x32xf32, #tpu.memory_space<vmem>>, vector<32x32xf32>
    %c0_3 = arith.constant 0 : index
    %c0_4 = arith.constant 0 : index
    %2 = vector.load %arg3[%c0_3, %c0_4] : memref<1x32xf32, #tpu.memory_space<vmem>>, vector<1x32xf32>
    %cst = arith.constant dense<0.000000e+00> : vector<8x32xf32>
    %3 = tpu.matmul %0, %1, %cst {dimension_numbers = #tpu.dot_dimension_numbers<[1], [0], [0], [1], [0, 0, 1, 1], [], []>} : vector<8x32xf32>, vector<32x32xf32>, vector<8x32xf32> -> vector<8x32xf32>
    %4 = vector.broadcast %2 : vector<1x32xf32> to vector<8x32xf32>
    %5 = arith.addf %3, %4 : vector<8x32xf32>
    %cst_5 = arith.constant 0.000000e+00 : f32
    %6 = vector.broadcast %cst_5 : f32 to vector<8x32xf32>
    %7 = arith.maximumf %5, %6 : vector<8x32xf32>
    %c0_6 = arith.constant 0 : index
    %c0_7 = arith.constant 0 : index
    %8 = vector.load %arg4[%c0_6, %c0_7] : memref<32x32xf32, #tpu.memory_space<vmem>>, vector<32x32xf32>
    %c0_8 = arith.constant 0 : index
    %c0_9 = arith.constant 0 : index
    %9 = vector.load %arg5[%c0_8, %c0_9] : memref<1x32xf32, #tpu.memory_space<vmem>>, vector<1x32xf32>
    %cst_10 = arith.constant dense<0.000000e+00> : vector<8x32xf32>
    %10 = tpu.matmul %7, %8, %cst_10 {dimension_numbers = #tpu.dot_dimension_numbers<[1], [0], [0], [1], [0, 0, 1, 1], [], []>} : vector<8x32xf32>, vector<32x32xf32>, vector<8x32xf32> -> vector<8x32xf32>
    %11 = vector.broadcast %9 : vector<1x32xf32> to vector<8x32xf32>
    %12 = arith.addf %10, %11 : vector<8x32xf32>
    %cst_11 = arith.constant 0.000000e+00 : f32
    %13 = vector.broadcast %cst_11 : f32 to vector<8x32xf32>
    %14 = arith.maximumf %12, %13 : vector<8x32xf32>
    %c0_12 = arith.constant 0 : index
    %c0_13 = arith.constant 0 : index
    %15 = vector.load %arg6[%c0_12, %c0_13] : memref<32x1xf32, #tpu.memory_space<vmem>>, vector<32x1xf32>
    %c0_14 = arith.constant 0 : index
    %c0_15 = arith.constant 0 : index
    %16 = vector.load %arg7[%c0_14, %c0_15] : memref<1x1xf32, #tpu.memory_space<vmem>>, vector<1x1xf32>
    %cst_16 = arith.constant dense<0.000000e+00> : vector<8x1xf32>
    %17 = tpu.matmul %14, %15, %cst_16 {dimension_numbers = #tpu.dot_dimension_numbers<[1], [0], [0], [1], [0, 0, 1, 1], [], []>} : vector<8x32xf32>, vector<32x1xf32>, vector<8x1xf32> -> vector<8x1xf32>
    %18 = vector.broadcast %16 : vector<1x1xf32> to vector<8x1xf32>
    %19 = arith.addf %17, %18 : vector<8x1xf32>
    %20 = arith.negf %19 : vector<8x1xf32>
    %21 = math.exp %20 : vector<8x1xf32>
    %cst_17 = arith.constant 1.000000e+00 : f32
    %22 = vector.broadcast %cst_17 : f32 to vector<8x1xf32>
    %23 = arith.addf %22, %21 : vector<8x1xf32>
    %24 = arith.divf %22, %23 : vector<8x1xf32>
    %25 = tpu.transpose %24, [1, 0] : vector<8x1xf32> -> vector<1x8xf32>
    %c0_18 = arith.constant 0 : index
    %c0_19 = arith.constant 0 : index
    %26 = vector.load %arg8[%c0_18, %c0_19] : memref<1x8xf32, #tpu.memory_space<vmem>>, vector<1x8xf32>
    tpu.vector_store %arg8[%c0_18, %c0_19], %25 {strides = array<i32>} : memref<1x8xf32, #tpu.memory_space<vmem>>, vector<1x8xf32>,
    return
  }
  func.func @transform_0(%arg0: i32) -> (i32, i32) {
    %c0_i32 = arith.constant 0 : i32
    %c0_i32_0 = arith.constant 0 : i32
    return %arg0, %c0_i32 : i32, i32
  }
  func.func @transform_1(%arg0: i32) -> (i32, i32) {
    %c0_i32 = arith.constant 0 : i32
    %c0_i32_0 = arith.constant 0 : i32
    %c0_i32_1 = arith.constant 0 : i32
    return %c0_i32, %c0_i32_0 : i32, i32
  }
  func.func @transform_2(%arg0: i32) -> (i32, i32) {
    %c0_i32 = arith.constant 0 : i32
    %c0_i32_0 = arith.constant 0 : i32
    %c0_i32_1 = arith.constant 0 : i32
    return %c0_i32, %c0_i32_0 : i32, i32
  }
  func.func @transform_3(%arg0: i32) -> (i32, i32) {
    %c0_i32 = arith.constant 0 : i32
    %c0_i32_0 = arith.constant 0 : i32
    %c0_i32_1 = arith.constant 0 : i32
    return %c0_i32, %c0_i32_0 : i32, i32
  }
  func.func @transform_4(%arg0: i32) -> (i32, i32) {
    %c0_i32 = arith.constant 0 : i32
    %c0_i32_0 = arith.constant 0 : i32
    %c0_i32_1 = arith.constant 0 : i32
    return %c0_i32, %c0_i32_0 : i32, i32
  }
  func.func @transform_5(%arg0: i32) -> (i32, i32) {
    %c0_i32 = arith.constant 0 : i32
    %c0_i32_0 = arith.constant 0 : i32
    %c0_i32_1 = arith.constant 0 : i32
    return %c0_i32, %c0_i32_0 : i32, i32
  }
  func.func @transform_6(%arg0: i32) -> (i32, i32) {
    %c0_i32 = arith.constant 0 : i32
    %c0_i32_0 = arith.constant 0 : i32
    %c0_i32_1 = arith.constant 0 : i32
    return %c0_i32, %c0_i32_0 : i32, i32
  }
  func.func @transform_7(%arg0: i32) -> (i32, i32) {
    %c0_i32 = arith.constant 0 : i32
    %c0_i32_0 = arith.constant 0 : i32
    return %c0_i32, %arg0 : i32, i32
  }
}

</mosaic_0001>

<llo_original>
// kernel: tpu_custom_call.1
$region0: #{tpu_custom_call.1}
  #allocation0 [shape = 'u32[]', space=smem, size = 0x4, offset = 0x4, fixed_abs, tag = 'smem constant byte address 0x4 - core index']
  #allocation1 [shape = 'u32[144,128]{1,0:T(1,128)}', space=vmem, size = 0x12000, scoped, tag = 'internal scratch']
  #allocation2 [shape = 'f32[1,1]{1,0:T(1,128)S(1)}', space=vmem, size = 0x200, scoped, tag = 'scoped memory for tpu_custom_call.1']
  %s0 = inlined_call_operand.hbm [shape: f32[8,32], index: 0, kind: input, shape index: {}]
  %s1 = inlined_call_operand.vmem [shape: f32[32,32], index: 1, kind: input, shape index: {}]
  %s2 = inlined_call_operand.vmem [shape: f32[1,32], index: 2, kind: input, shape index: {}]
  %s3 = inlined_call_operand.hbm [shape: f32[32,32], index: 3, kind: input, shape index: {}]
  %s4 = inlined_call_operand.vmem [shape: f32[1,32], index: 4, kind: input, shape index: {}]
  %s5 = inlined_call_operand.vmem [shape: f32[32,1], index: 5, kind: input, shape index: {}]
  %s6 = inlined_call_operand.<no memory space> [shape: f32[1,1], index: 6, kind: input, shape index: {}]
  %s7 = inlined_call_operand.hbm [shape: f32[1,8], index: 7, kind: output, shape index: {}]
  %s8 = sld [smem:[#allocation0]]
  $region46: #{tpu_custom_call.1} parent=0
    _
  %s10 = ssub.s32 1, %s8
  %s11 = scalar_select 0, %s10, %s8
  %v12 = vstv %s6
  %13 = vst [vmem:[#allocation2] sm:$0x1] %v12
  $region1: #{tpu_custom_call.1} parent=0
    #allocation3 [shape = 'u8[4096]{0}', space=vmem, size = 0x1000, scoped, tag = 'input window, operand 0, single buffered']
    #allocation4 [shape = 's32[1]{0}', space=sflag, size = 0x4, scoped, tag = 'scoped memory for tpu_custom_call.1']
    #allocation5 [shape = 's32[1]{0}', space=sflag, size = 0x4, scoped, tag = 'scoped memory for tpu_custom_call.1']
    #allocation6 [shape = 'u8[16384]{0}', space=vmem, size = 0x4000, scoped, tag = 'input window, operand 3, single buffered']
    #allocation7 [shape = 's32[1]{0}', space=sflag, size = 0x4, scoped, tag = 'scoped memory for tpu_custom_call.1']
    #allocation8 [shape = 'u8[512]{0}', space=vmem, size = 0x400, scoped, tag = 'output window, operand 0, single buffered']
    %14 = vsyncpa [#allocation4], 0
    %15 = vsyncpa [#allocation7], 0
    %16 = vsyncpa [#allocation5], 0
    // Predicated region
    $region2: #{tpu_custom_call.1} parent=1 // pred_check
      _
    $region3: #{tpu_custom_call.1} parent=1 // pred_check_branch
      %18 = sbr.rel (0) target = $region5
    $region4: #{tpu_custom_call.1} parent=1 // pred_region
      %s20 = ssub.s32 128, 128
      %21 = vsyncadd [#allocation4], %s20
      %s23 = sshll.u32 [#allocation3], 4
      %s24 = int_to_ptr.vmem [resolvable:$true] %s23
      %26 = dma.hbm_to_vmem [thread:$0]  %s0, 128, %s24, [#allocation4]
    $region5: #{tpu_custom_call.1} parent=1 // pred_fallthru
      _
    // Predicated region
    $region6: #{tpu_custom_call.1} parent=1 // pred_check
      _
    $region7: #{tpu_custom_call.1} parent=1 // pred_check_branch
      %28 = sbr.rel (0) target = $region9
    $region8: #{tpu_custom_call.1} parent=1 // pred_region
      _
    $region9: #{tpu_custom_call.1} parent=1 // pred_fallthru
      _
    // Predicated region
    $region10: #{tpu_custom_call.1} parent=1 // pred_check
      _
    $region11: #{tpu_custom_call.1} parent=1 // pred_check_branch
      %30 = sbr.rel (0) target = $region13
    $region12: #{tpu_custom_call.1} parent=1 // pred_region
      _
    $region13: #{tpu_custom_call.1} parent=1 // pred_fallthru
      _
    // Predicated region
    $region14: #{tpu_custom_call.1} parent=1 // pred_check
      _
    $region15: #{tpu_custom_call.1} parent=1 // pred_check_branch
      %32 = sbr.rel (0) target = $region17
    $region16: #{tpu_custom_call.1} parent=1 // pred_region
      %s34 = ssub.s32 512, 512
      %35 = vsyncadd [#allocation7], %s34
      %s36 = sshll.u32 [#allocation6], 4
      %s37 = int_to_ptr.vmem [resolvable:$true] %s36
      %42 = dma.hbm_to_vmem [thread:$0]  %s3, 512, %s37, [#allocation7], 128, 128, 8
    $region17: #{tpu_custom_call.1} parent=1 // pred_fallthru
      _
    // Predicated region
    $region18: #{tpu_custom_call.1} parent=1 // pred_check
      _
    $region19: #{tpu_custom_call.1} parent=1 // pred_check_branch
      %44 = sbr.rel (0) target = $region21
    $region20: #{tpu_custom_call.1} parent=1 // pred_region
      _
    $region21: #{tpu_custom_call.1} parent=1 // pred_fallthru
      _
    // Predicated region
    $region22: #{tpu_custom_call.1} parent=1 // pred_check
      _
    $region23: #{tpu_custom_call.1} parent=1 // pred_check_branch
      %46 = sbr.rel (0) target = $region25
    $region24: #{tpu_custom_call.1} parent=1 // pred_region
      _
    $region25: #{tpu_custom_call.1} parent=1 // pred_fallthru
      _
    // Predicated region
    $region26: #{tpu_custom_call.1} parent=1 // pred_check
      _
    $region27: #{tpu_custom_call.1} parent=1 // pred_check_branch
      %48 = sbr.rel (0) target = $region29
    $region28: #{tpu_custom_call.1} parent=1 // pred_region
      _
    $region29: #{tpu_custom_call.1} parent=1 // pred_fallthru
      _
    // Predicated region
    $region30: #{tpu_custom_call.1} parent=1 // pred_check
      _
    $region31: #{tpu_custom_call.1} parent=1 // pred_check_branch
      %50 = sbr.rel (0) target = $region33
    $region32: #{tpu_custom_call.1} parent=1 // pred_region
      %51 = dma.done [#allocation4], 128
    $region33: #{tpu_custom_call.1} parent=1 // pred_fallthru
      _
    // Predicated region
    $region34: #{tpu_custom_call.1} parent=1 // pred_check
      _
    $region35: #{tpu_custom_call.1} parent=1 // pred_check_branch
      %53 = sbr.rel (0) target = $region37
    $region36: #{tpu_custom_call.1} parent=1 // pred_region
      %54 = dma.done [#allocation7], 512
    $region37: #{tpu_custom_call.1} parent=1 // pred_fallthru
      _
    %v55 = vld [vmem:[#allocation3] sm:$0xff]
    %v56 = vld [vmem:[%s1] sm:$0xff]
    %v57 = vld [vmem:[%s1 + $0x8] sm:$0xff]
    %v58 = vld [vmem:[%s1 + $0x10] sm:$0xff]
    %v59 = vld [vmem:[%s1 + $0x18] sm:$0xff]
    %v60 = vld [vmem:[%s2] sm:$0x1]
    %v62 = vlaneseq
    %v63 = vshrl.u32 %v62, 7
    %v64 = vsub.s32 0, %v63
    %v65 = vrot.slane %v60, %v64
    %vm67 = vcmask 261120
    %v69 = vsel %vm67, %v55, 0
    %71 = vmatprep.subr.mxu0 0.0
    %72 = vmatpush1.msra.mxu0 0.0
    %73 = vmatprep.subr.mxu0 0.0
    %74 = vmatpush1.msra.mxu0 0.0
    %75 = vmatprep.subr.mxu0 0.0
    %76 = vmatpush1.msra.mxu0 0.0
    %77 = vmatprep.subr.mxu0 0.0
    %78 = vmatpush1.msra.mxu0 0.0
    %79 = vmatprep.subr.mxu0 0.0
    %80 = vmatpush1.msra.mxu0 0.0
    %81 = vmatprep.subr.mxu0 0.0
    %82 = vmatpush1.msra.mxu0 0.0
    %83 = vmatprep.subr.mxu0 0.0
    %84 = vmatpush1.msra.mxu0 0.0
    %85 = vmatprep.subr.mxu0 0.0
    %86 = vmatpush1.msra.mxu0 0.0
    %87 = vmatprep.subr.mxu0 0.0
    %88 = vmatpush1.msra.mxu0 0.0
    %89 = vmatprep.subr.mxu0 0.0
    %90 = vmatpush1.msra.mxu0 0.0
    %91 = vmatprep.subr.mxu0 0.0
    %92 = vmatpush1.msra.mxu0 0.0
    %93 = vmatprep.subr.mxu0 0.0
    %94 = vmatpush1.msra.mxu0 0.0
    %95 = vmatprep.subr.mxu0 0.0
    %96 = vmatpush1.msra.mxu0 %v59
    %97 = vmatprep.subr.mxu0 0.0
    %98 = vmatpush1.msra.mxu0 %v58
    %99 = vmatprep.subr.mxu0 0.0
    %100 = vmatpush1.msra.mxu0 %v57
    %101 = vmatprep.subr.mxu0 0.0
    %102 = vmatpush1.msra.mxu0 %v56
    %103 = vmatprep.subr.mxu0 0.0
    %104 = vmatpush2.msra.mxu0 0.0
    %105 = vmatprep.subr.mxu0 0.0
    %106 = vmatpush2.msra.mxu0 0.0
    %107 = vmatprep.subr.mxu0 0.0
    %108 = vmatpush2.msra.mxu0 0.0
    %109 = vmatprep.subr.mxu0 0.0
    %110 = vmatpush2.msra.mxu0 0.0
    %111 = vmatprep.subr.mxu0 0.0
    %112 = vmatpush2.msra.mxu0 0.0
    %113 = vmatprep.subr.mxu0 0.0
    %114 = vmatpush2.msra.mxu0 0.0
    %115 = vmatprep.subr.mxu0 0.0
    %116 = vmatpush2.msra.mxu0 0.0
    %117 = vmatprep.subr.mxu0 0.0
    %118 = vmatpush2.msra.mxu0 0.0
    %119 = vmatprep.subr.mxu0 0.0
    %120 = vmatpush2.msra.mxu0 0.0
    %121 = vmatprep.subr.mxu0 0.0
    %122 = vmatpush2.msra.mxu0 0.0
    %123 = vmatprep.subr.mxu0 0.0
    %124 = vmatpush2.msra.mxu0 0.0
    %125 = vmatprep.subr.mxu0 0.0
    %126 = vmatpush2.msra.mxu0 0.0
    %127 = vmatprep.subr.mxu0 0.0
    %128 = vmatpush2.msra.mxu0 0.0
    %129 = vmatprep.subr.mxu0 0.0
    %130 = vmatpush2.msra.mxu0 0.0
    %131 = vmatprep.subr.mxu0 0.0
    %132 = vmatpush2.msra.mxu0 0.0
    %133 = vmatprep.subr.mxu0 0.0
    %134 = vmatpush2.msra.mxu0 0.0
    %135 = vmatprep.mubr.f32.mxu0 0.0
    %136 = vmatmul.mubr.f32.gmra.mxu0 %v69
    %v137 = vpop.f32.mrf.mxu0
    %v138 = vadd.f32 %v65, %v137
    %v139 = vpop.f32.mrf.mxu0
    %140 = vdwg.mxu0
    %v141 = vmax.f32 %v138, 0.0
    %v142 = vld [vmem:[#allocation6] sm:$0xff]
    %v143 = vld [vmem:[#allocation6 + $0x8] sm:$0xff]
    %v144 = vld [vmem:[#allocation6 + $0x10] sm:$0xff]
    %v145 = vld [vmem:[#allocation6 + $0x18] sm:$0xff]
    %v146 = vld [vmem:[%s4] sm:$0x1]
    %v148 = vlaneseq
    %v149 = vshrl.u32 %v148, 7
    %v150 = vsub.s32 0, %v149
    %v151 = vrot.slane %v146, %v150
    %v154 = vsel %vm67, %v141, 0
    %156 = vmatprep.subr.mxu0 0.0
    %157 = vmatpush1.msra.mxu0 0.0
    %158 = vmatprep.subr.mxu0 0.0
    %159 = vmatpush1.msra.mxu0 0.0
    %160 = vmatprep.subr.mxu0 0.0
    %161 = vmatpush1.msra.mxu0 0.0
    %162 = vmatprep.subr.mxu0 0.0
    %163 = vmatpush1.msra.mxu0 0.0
    %164 = vmatprep.subr.mxu0 0.0
    %165 = vmatpush1.msra.mxu0 0.0
    %166 = vmatprep.subr.mxu0 0.0
    %167 = vmatpush1.msra.mxu0 0.0
    %168 = vmatprep.subr.mxu0 0.0
    %169 = vmatpush1.msra.mxu0 0.0
    %170 = vmatprep.subr.mxu0 0.0
    %171 = vmatpush1.msra.mxu0 0.0
    %172 = vmatprep.subr.mxu0 0.0
    %173 = vmatpush1.msra.mxu0 0.0
    %174 = vmatprep.subr.mxu0 0.0
    %175 = vmatpush1.msra.mxu0 0.0
    %176 = vmatprep.subr.mxu0 0.0
    %177 = vmatpush1.msra.mxu0 0.0
    %178 = vmatprep.subr.mxu0 0.0
    %179 = vmatpush1.msra.mxu0 0.0
    %180 = vmatprep.subr.mxu0 0.0
    %181 = vmatpush1.msra.mxu0 %v145
    %182 = vmatprep.subr.mxu0 0.0
    %183 = vmatpush1.msra.mxu0 %v144
    %184 = vmatprep.subr.mxu0 0.0
    %185 = vmatpush1.msra.mxu0 %v143
    %186 = vmatprep.subr.mxu0 0.0
    %187 = vmatpush1.msra.mxu0 %v142
    %188 = vmatprep.subr.mxu0 0.0
    %189 = vmatpush2.msra.mxu0 0.0
    %190 = vmatprep.subr.mxu0 0.0
    %191 = vmatpush2.msra.mxu0 0.0
    %192 = vmatprep.subr.mxu0 0.0
    %193 = vmatpush2.msra.mxu0 0.0
    %194 = vmatprep.subr.mxu0 0.0
    %195 = vmatpush2.msra.mxu0 0.0
    %196 = vmatprep.subr.mxu0 0.0
    %197 = vmatpush2.msra.mxu0 0.0
    %198 = vmatprep.subr.mxu0 0.0
    %199 = vmatpush2.msra.mxu0 0.0
    %200 = vmatprep.subr.mxu0 0.0
    %201 = vmatpush2.msra.mxu0 0.0
    %202 = vmatprep.subr.mxu0 0.0
    %203 = vmatpush2.msra.mxu0 0.0
    %204 = vmatprep.subr.mxu0 0.0
    %205 = vmatpush2.msra.mxu0 0.0
    %206 = vmatprep.subr.mxu0 0.0
    %207 = vmatpush2.msra.mxu0 0.0
    %208 = vmatprep.subr.mxu0 0.0
    %209 = vmatpush2.msra.mxu0 0.0
    %210 = vmatprep.subr.mxu0 0.0
    %211 = vmatpush2.msra.mxu0 0.0
    %212 = vmatprep.subr.mxu0 0.0
    %213 = vmatpush2.msra.mxu0 0.0
    %214 = vmatprep.subr.mxu0 0.0
    %215 = vmatpush2.msra.mxu0 0.0
    %216 = vmatprep.subr.mxu0 0.0
    %217 = vmatpush2.msra.mxu0 0.0
    %218 = vmatprep.subr.mxu0 0.0
    %219 = vmatpush2.msra.mxu0 0.0
    %220 = vmatprep.mubr.f32.mxu0 0.0
    %221 = vmatmul.mubr.f32.gmra.mxu0 %v154
    %v222 = vpop.f32.mrf.mxu0
    %v223 = vadd.f32 %v151, %v222
    %v224 = vpop.f32.mrf.mxu0
    %225 = vdwg.mxu0
    %v226 = vmax.f32 %v223, 0.0
    %v227 = vld [vmem:[%s5] sm:$0xff]
    %v228 = vld [vmem:[%s5 + $0x8] sm:$0xff]
    %v229 = vld [vmem:[%s5 + $0x10] sm:$0xff]
    %v230 = vld [vmem:[%s5 + $0x18] sm:$0xff]
    %v231 = vld [vmem:[#allocation2] sm:$0x1]
    %v233 = vlaneseq
    %v234 = vshrl.u32 %v233, 7
    %v235 = vsub.s32 0, %v234
    %v236 = vrot.slane %v231, %v235
    %v239 = vsel %vm67, %v226, 0
    %241 = vmatprep.subr.mxu0 0.0
    %242 = vmatpush1.msra.mxu0 0.0
    %243 = vmatprep.subr.mxu0 0.0
    %244 = vmatpush1.msra.mxu0 0.0
    %245 = vmatprep.subr.mxu0 0.0
    %246 = vmatpush1.msra.mxu0 0.0
    %247 = vmatprep.subr.mxu0 0.0
    %248 = vmatpush1.msra.mxu0 0.0
    %249 = vmatprep.subr.mxu0 0.0
    %250 = vmatpush1.msra.mxu0 0.0
    %251 = vmatprep.subr.mxu0 0.0
    %252 = vmatpush1.msra.mxu0 0.0
    %253 = vmatprep.subr.mxu0 0.0
    %254 = vmatpush1.msra.mxu0 0.0
    %255 = vmatprep.subr.mxu0 0.0
    %256 = vmatpush1.msra.mxu0 0.0
    %257 = vmatprep.subr.mxu0 0.0
    %258 = vmatpush1.msra.mxu0 0.0
    %259 = vmatprep.subr.mxu0 0.0
    %260 = vmatpush1.msra.mxu0 0.0
    %261 = vmatprep.subr.mxu0 0.0
    %262 = vmatpush1.msra.mxu0 0.0
    %263 = vmatprep.subr.mxu0 0.0
    %264 = vmatpush1.msra.mxu0 0.0
    %265 = vmatprep.subr.mxu0 0.0
    %266 = vmatpush1.msra.mxu0 %v230
    %267 = vmatprep.subr.mxu0 0.0
    %268 = vmatpush1.msra.mxu0 %v229
    %269 = vmatprep.subr.mxu0 0.0
    %270 = vmatpush1.msra.mxu0 %v228
    %271 = vmatprep.subr.mxu0 0.0
    %272 = vmatpush1.msra.mxu0 %v227
    %273 = vmatprep.subr.mxu0 0.0
    %274 = vmatpush2.msra.mxu0 0.0
    %275 = vmatprep.subr.mxu0 0.0
    %276 = vmatpush2.msra.mxu0 0.0
    %277 = vmatprep.subr.mxu0 0.0
    %278 = vmatpush2.msra.mxu0 0.0
    %279 = vmatprep.subr.mxu0 0.0
    %280 = vmatpush2.msra.mxu0 0.0
    %281 = vmatprep.subr.mxu0 0.0
    %282 = vmatpush2.msra.mxu0 0.0
    %283 = vmatprep.subr.mxu0 0.0
    %284 = vmatpush2.msra.mxu0 0.0
    %285 = vmatprep.subr.mxu0 0.0
    %286 = vmatpush2.msra.mxu0 0.0
    %287 = vmatprep.subr.mxu0 0.0
    %288 = vmatpush2.msra.mxu0 0.0
    %289 = vmatprep.subr.mxu0 0.0
    %290 = vmatpush2.msra.mxu0 0.0
    %291 = vmatprep.subr.mxu0 0.0
    %292 = vmatpush2.msra.mxu0 0.0
    %293 = vmatprep.subr.mxu0 0.0
    %294 = vmatpush2.msra.mxu0 0.0
    %295 = vmatprep.subr.mxu0 0.0
    %296 = vmatpush2.msra.mxu0 0.0
    %297 = vmatprep.subr.mxu0 0.0
    %298 = vmatpush2.msra.mxu0 0.0
    %299 = vmatprep.subr.mxu0 0.0
    %300 = vmatpush2.msra.mxu0 0.0
    %301 = vmatprep.subr.mxu0 0.0
    %302 = vmatpush2.msra.mxu0 0.0
    %303 = vmatprep.subr.mxu0 0.0
    %304 = vmatpush2.msra.mxu0 0.0
    %305 = vmatprep.mubr.f32.mxu0 0.0
    %306 = vmatmul.mubr.f32.gmra.mxu0 %v239
    %v307 = vpop.f32.mrf.mxu0
    %v308 = vadd.f32 %v236, %v307
    %v309 = vpop.f32.mrf.mxu0
    %310 = vdwg.mxu0
    %v311 = vxor.u32 %v308, 2147483648
    %v312 = vmul.f32 %v311, 1.442695
    %v313 = vpow.pop %v312
    %v314 = vadd.f32 %v313, 1.0
    %v315 = vrcp.pop %v314
    %v316 = vmul.f32 1.0, %v315
    %317 = vxpose.xlu0.b32.start [1/16] %v316, 128
    %318 = vxpose.xlu0.b32.cont [2/16] 0.0, 128
    %319 = vxpose.xlu0.b32.cont [3/16] 0.0, 128
    %320 = vxpose.xlu0.b32.cont [4/16] 0.0, 128
    %321 = vxpose.xlu0.b32.cont [5/16] 0.0, 128
    %322 = vxpose.xlu0.b32.cont [6/16] 0.0, 128
    %323 = vxpose.xlu0.b32.cont [7/16] 0.0, 128
    %324 = vxpose.xlu0.b32.cont [8/16] 0.0, 128
    %325 = vxpose.xlu0.b32.cont [9/16] 0.0, 128
    %326 = vxpose.xlu0.b32.cont [10/16] 0.0, 128
    %327 = vxpose.xlu0.b32.cont [11/16] 0.0, 128
    %328 = vxpose.xlu0.b32.cont [12/16] 0.0, 128
    %329 = vxpose.xlu0.b32.cont [13/16] 0.0, 128
    %330 = vxpose.xlu0.b32.cont [14/16] 0.0, 128
    %331 = vxpose.xlu0.b32.cont [15/16] 0.0, 128
    %332 = vxpose.xlu0.b32.end [16/16] 0.0, 128
    %v333 = vpop.trf.xlu0
    %v334 = vpop.trf.xlu0
    %v335 = vpop.trf.xlu0
    %v336 = vpop.trf.xlu0
    %v337 = vpop.trf.xlu0
    %v338 = vpop.trf.xlu0
    %v339 = vpop.trf.xlu0
    %v340 = vpop.trf.xlu0
    %v341 = vpop.trf.xlu0
    %v342 = vpop.trf.xlu0
    %v343 = vpop.trf.xlu0
    %v344 = vpop.trf.xlu0
    %v345 = vpop.trf.xlu0
    %v346 = vpop.trf.xlu0
    %v347 = vpop.trf.xlu0
    %v348 = vpop.trf.xlu0
    %vm349 = vcmask 57344
    %350 = vst.msk [vmem:[#allocation8] sm:$0x1] %vm349, %v333
    // Predicated region
    $region38: #{tpu_custom_call.1} parent=1 // pred_check
      _
    $region39: #{tpu_custom_call.1} parent=1 // pred_check_branch
      %352 = sbr.rel (0) target = $region41
    $region40: #{tpu_custom_call.1} parent=1 // pred_region
      %s354 = ssub.s32 16, 16
      %355 = vsyncadd [#allocation5], %s354
      %s357 = sshll.u32 [#allocation8], 4
      %s358 = int_to_ptr.vmem [resolvable:$true] %s357
      %360 = dma.vmem_to_hbm [thread:$0]  %s358, 16, %s7, [#allocation5]
    $region41: #{tpu_custom_call.1} parent=1 // pred_fallthru
      _
    // Predicated region
    $region42: #{tpu_custom_call.1} parent=1 // pred_check
      _
    $region43: #{tpu_custom_call.1} parent=1 // pred_check_branch
      %362 = sbr.rel (0) target = $region45
    $region44: #{tpu_custom_call.1} parent=1 // pred_region
      %363 = dma.done [#allocation5], 16
    $region45: #{tpu_custom_call.1} parent=1 // pred_fallthru
      _
    %364 = vsyncpa [#allocation4], 1
    %365 = vsyncpa [#allocation7], 1
    %366 = vsyncpa [#allocation5], 1

</llo_original>
